<compile_context>
chip_gen: v7x
topology: tpu7x:2x2x1
jax: 0.10.0
libtpu: 0.0.40
codegen_flags: <defaults>
</compile_context>

<pallas_src>
import numpy as np
import jax
import jax.numpy as jnp
from jax.experimental import pallas as pl
from jax.experimental.pallas import tpu as pltpu


def _round_up(x, m):
    return ((x + m - 1) // m) * m


def merge_layer_kernel(x1_ref, x2_ref, w0_ref, b0_ref, w1_ref, b1_ref,
                       w2_ref, b2_ref, o_ref):
    # x1_ref: (tb, dim1)  input dtype (f32)
    # x2_ref: (tb, dim2)  input dtype (f32)
    # w0_ref: (dim1, dim3), w1_ref: (dim2, dim3), w2_ref: (dim3, dim4)  compute dtype
    # b0_ref/b1_ref: (1, dim3) f32 ; b2_ref: (1, dim4) f32
    # o_ref : (tb, dim4)  output dtype (unpadded last dim == full array dim)
    cdt = w0_ref.dtype

    # Cast activations to the compute dtype in-kernel (VPU slot has slack).
    x1 = x1_ref[...].astype(cdt)
    x2 = x2_ref[...].astype(cdt)

    # Two small MXU matmuls with f32 accumulation.
    h0 = jnp.dot(x1, w0_ref[...], preferred_element_type=jnp.float32) + b0_ref[...]
    h1 = jnp.dot(x2, w1_ref[...], preferred_element_type=jnp.float32) + b1_ref[...]

    # Gate + ReLU in f32 on the VPU; cast down only for the second matmul.
    h = jnp.maximum(h0 * h1, 0.0).astype(cdt)

    y = jnp.dot(h, w2_ref[...], preferred_element_type=jnp.float32) + b2_ref[...]
    o_ref[...] = y.astype(o_ref.dtype)


def prepare_params(w0, b0, w1, b1, w2, b2, compute_dtype=jnp.bfloat16):
    """One-time parameter prep (hoisted out of the per-call path).

    Weights are expected already transposed relative to torch.nn.Linear:
      w0: [dim1, dim3], w1: [dim2, dim3], w2: [dim3, dim4]; biases 1-D.
    """
    return (w0.astype(compute_dtype), b0.astype(jnp.float32)[None, :],
            w1.astype(compute_dtype), b1.astype(jnp.float32)[None, :],
            w2.astype(compute_dtype), b2.astype(jnp.float32)[None, :])


def merge_layer(x1, x2, params, *, tile_b=2048):
    """y = relu((x1 @ w0 + b0) * (x2 @ w1 + b1)) @ w2 + b2"""
    w0, b0, w1, b1, w2, b2 = params
    B, dim1 = x1.shape
    _, dim2 = x2.shape
    dim3 = w0.shape[1]
    dim4 = w2.shape[1]
    out_dtype = x1.dtype

    # --- batch tiling: large tiles, cdiv grid, NO explicit padding ----------
    tb = max(8, (int(tile_b) // 8) * 8)
    # Keep >= 4 grid steps when the batch allows it (2 per v7x TensorCore, so
    # each core retains i+1 prefetch / double-buffering).
    if B >= 4 * 8 and pl.cdiv(B, tb) < 4:
        tb = max(8, _round_up(pl.cdiv(B, 4), 8))
    tb = min(tb, _round_up(B, 8))
    grid = (pl.cdiv(B, tb),)          # tail block (if any) is masked by Pallas

    # --- specs ---------------------------------------------------------------
    # Last-dim of every block equals the full array dim -> tiling rule is
    # satisfied even for narrow feature dims (dim4=16 stays unpadded).
    x1_spec = pl.BlockSpec((tb, dim1), lambda i: (i, 0))
    x2_spec = pl.BlockSpec((tb, dim2), lambda i: (i, 0))
    w0_spec = pl.BlockSpec((dim1, dim3), lambda i: (0, 0))
    b0_spec = pl.BlockSpec((1, dim3), lambda i: (0, 0))
    w1_spec = pl.BlockSpec((dim2, dim3), lambda i: (0, 0))
    b1_spec = pl.BlockSpec((1, dim3), lambda i: (0, 0))
    w2_spec = pl.BlockSpec((dim3, dim4), lambda i: (0, 0))
    b2_spec = pl.BlockSpec((1, dim4), lambda i: (0, 0))
    out_spec = pl.BlockSpec((tb, dim4), lambda i: (i, 0))

    # --- VMEM budget (double-buffered I/O tiles + weights + intermediates),
    #     clamped to <= 48 MiB so there is headroom on v7x (64 MiB physical).
    in_itemsize = jnp.dtype(x1.dtype).itemsize
    out_itemsize = jnp.dtype(out_dtype).itemsize
    w_itemsize = jnp.dtype(w0.dtype).itemsize
    est = (2 * tb * (_round_up(dim1, 128) + _round_up(dim2, 128)) * in_itemsize
           + 2 * tb * _round_up(dim4, 128) * out_itemsize
           + 4 * tb * _round_up(dim3, 128) * 4                      # h0/h1/h
           + 2 * (_round_up(dim1, 8) + _round_up(dim2, 8) + _round_up(dim3, 8))
               * _round_up(max(dim3, dim4), 128) * w_itemsize       # weights
           + 6 * 8 * _round_up(max(dim3, dim4), 128) * 4)           # biases
    vmem_limit = int(min(48 * 1024 * 1024, max(16 * 1024 * 1024, 2 * est)))

    flops = 2 * B * dim3 * (dim1 + dim2 + dim4)
    bytes_accessed = (x1.size * in_itemsize + x2.size * in_itemsize
                      + (w0.size + w1.size + w2.size) * w_itemsize
                      + (b0.size + b1.size + b2.size) * 4
                      + B * dim4 * out_itemsize)

    return pl.pallas_call(
        merge_layer_kernel,
        out_shape=jax.ShapeDtypeStruct((B, dim4), out_dtype),
        grid_spec=pltpu.PrefetchScalarGridSpec(
            num_scalar_prefetch=0,
            grid=grid,
            in_specs=[x1_spec, x2_spec, w0_spec, b0_spec, w1_spec, b1_spec,
                      w2_spec, b2_spec],
            out_specs=out_spec,
        ),
        compiler_params=pltpu.CompilerParams(
            dimension_semantics=("parallel",),
            vmem_limit_bytes=vmem_limit),
        cost_estimate=pl.CostEstimate(
            flops=flops, transcendentals=0, bytes_accessed=bytes_accessed),
    )(x1, x2, w0, b0, w1, b1, w2, b2)


def xavier_normal(key, fan_out, fan_in, dtype=jnp.float32):
    # torch.nn.init.xavier_normal_ on a [out, in] weight.
    std = np.sqrt(2.0 / (fan_in + fan_out))
    return jax.random.normal(key, (fan_out, fan_in), dtype) * std


def linear_bias_init(key, fan_in, fan_out, dtype=jnp.float32):
    # PyTorch Linear default bias init: U(-1/sqrt(fan_in), 1/sqrt(fan_in)).
    bound = 1.0 / np.sqrt(fan_in)
    return jax.random.uniform(key, (fan_out,), dtype, -bound, bound)


def _reference(x1, x2, W0, b0, W1, b1, W2, b2):
    h = jnp.maximum((x1 @ W0.T + b0) * (x2 @ W1.T + b1), 0.0)
    return h @ W2.T + b2


if __name__ == "__main__":
    # Small shapes consistent with MergeLayer_0(dim1, dim2, dim3, dim4).
    B, dim1, dim2, dim3, dim4 = 8, 32, 48, 64, 16

    key = jax.random.PRNGKey(0)
    k_x1, k_x2, k_w0, k_b0, k_w1, k_b1, k_w2, k_b2 = jax.random.split(key, 8)

    x1 = jax.random.normal(k_x1, (B, dim1), jnp.float32)
    x2 = jax.random.normal(k_x2, (B, dim2), jnp.float32)

    # Parameters stored torch-style as [out, in]; prepare_params takes them transposed.
    W0 = xavier_normal(k_w0, dim3, dim1)
    W1 = xavier_normal(k_w1, dim3, dim2)
    W2 = xavier_normal(k_w2, dim4, dim3)
    b0 = linear_bias_init(k_b0, dim1, dim3)
    b1 = linear_bias_init(k_b1, dim2, dim3)
    b2 = linear_bias_init(k_b2, dim3, dim4)

    params = prepare_params(W0.T, b0, W1.T, b1, W2.T, b2)

    # Single-block case (B=8 -> one grid step).
    y = jax.block_until_ready(merge_layer(x1, x2, params))
    y_ref = _reference(x1, x2, W0, b0, W1, b1, W2, b2)
    np.testing.assert_allclose(np.asarray(y), np.asarray(y_ref),
                               rtol=5e-2, atol=5e-2)

    # Multi-step grid with a masked tail block (B=100, tb=32 -> 4 steps, tail=4 rows).
    B2 = 100
    kx1b, kx2b = jax.random.split(jax.random.PRNGKey(1), 2)
    x1b = jax.random.normal(kx1b, (B2, dim1), jnp.float32)
    x2b = jax.random.normal(kx2b, (B2, dim2), jnp.float32)
    yb = jax.block_until_ready(merge_layer(x1b, x2b, params, tile_b=32))
    yb_ref = _reference(x1b, x2b, W0, b0, W1, b1, W2, b2)
    np.testing.assert_allclose(np.asarray(yb), np.asarray(yb_ref),
                               rtol=5e-2, atol=5e-2)

    print("KERNEL_OK")
</pallas_src>

<mosaic_0001>
module attributes {stable_mosaic.version = 11 : i64} {
  func.func @merge_layer_kernel(%arg0: i32, %arg1: memref<8x32xf32, #tpu.memory_space<vmem>>, %arg2: memref<8x48xf32, #tpu.memory_space<vmem>>, %arg3: memref<32x64xbf16, #tpu.memory_space<vmem>>, %arg4: memref<1x64xf32, #tpu.memory_space<vmem>>, %arg5: memref<48x64xbf16, #tpu.memory_space<vmem>>, %arg6: memref<1x64xf32, #tpu.memory_space<vmem>>, %arg7: memref<64x16xbf16, #tpu.memory_space<vmem>>, %arg8: memref<1x16xf32, #tpu.memory_space<vmem>>, %arg9: memref<8x16xf32, #tpu.memory_space<vmem>>) attributes {dimension_semantics = [#tpu.dimension_semantics<parallel>], iteration_bounds = array<i64: 1>, scalar_prefetch = 0 : i64, scratch_operands = 0 : i64, tpu.core_type = #tpu.core_type<tc>, window_params = [{transform_indices = @transform_0, window_bounds = array<i64: 8, 32>}, {transform_indices = @transform_1, window_bounds = array<i64: 8, 48>}, {pipeline_mode = #tpu.pipeline_mode<synchronous>, transform_indices = @transform_2, window_bounds = array<i64: 32, 64>}, {pipeline_mode = #tpu.pipeline_mode<synchronous>, transform_indices = @transform_3, window_bounds = array<i64: 1, 64>}, {pipeline_mode = #tpu.pipeline_mode<synchronous>, transform_indices = @transform_4, window_bounds = array<i64: 48, 64>}, {pipeline_mode = #tpu.pipeline_mode<synchronous>, transform_indices = @transform_5, window_bounds = array<i64: 1, 64>}, {pipeline_mode = #tpu.pipeline_mode<synchronous>, transform_indices = @transform_6, window_bounds = array<i64: 64, 16>}, {pipeline_mode = #tpu.pipeline_mode<synchronous>, transform_indices = @transform_7, window_bounds = array<i64: 1, 16>}, {transform_indices = @transform_8, window_bounds = array<i64: 8, 16>}]} {
    %c0 = arith.constant 0 : index
    %c0_0 = arith.constant 0 : index
    %0 = vector.load %arg1[%c0, %c0_0] : memref<8x32xf32, #tpu.memory_space<vmem>>, vector<8x32xf32>
    %1 = arith.truncf %0 : vector<8x32xf32> to vector<8x32xbf16>
    %c0_1 = arith.constant 0 : index
    %c0_2 = arith.constant 0 : index
    %2 = vector.load %arg2[%c0_1, %c0_2] : memref<8x48xf32, #tpu.memory_space<vmem>>, vector<8x48xf32>
    %3 = arith.truncf %2 : vector<8x48xf32> to vector<8x48xbf16>
    %c0_3 = arith.constant 0 : index
    %c0_4 = arith.constant 0 : index
    %4 = vector.load %arg3[%c0_3, %c0_4] : memref<32x64xbf16, #tpu.memory_space<vmem>>, vector<32x64xbf16>
    %cst = arith.constant dense<0.000000e+00> : vector<8x64xf32>
    %5 = tpu.matmul %1, %4, %cst {dimension_numbers = #tpu.dot_dimension_numbers<[1], [0], [0], [1], [0, 0, 1, 1], [], []>} : vector<8x32xbf16>, vector<32x64xbf16>, vector<8x64xf32> -> vector<8x64xf32>
    %c0_5 = arith.constant 0 : index
    %c0_6 = arith.constant 0 : index
    %6 = vector.load %arg4[%c0_5, %c0_6] : memref<1x64xf32, #tpu.memory_space<vmem>>, vector<1x64xf32>
    %7 = vector.broadcast %6 : vector<1x64xf32> to vector<8x64xf32>
    %8 = arith.addf %5, %7 : vector<8x64xf32>
    %c0_7 = arith.constant 0 : index
    %c0_8 = arith.constant 0 : index
    %9 = vector.load %arg5[%c0_7, %c0_8] : memref<48x64xbf16, #tpu.memory_space<vmem>>, vector<48x64xbf16>
    %cst_9 = arith.constant dense<0.000000e+00> : vector<8x64xf32>
    %10 = tpu.matmul %3, %9, %cst_9 {dimension_numbers = #tpu.dot_dimension_numbers<[1], [0], [0], [1], [0, 0, 1, 1], [], []>} : vector<8x48xbf16>, vector<48x64xbf16>, vector<8x64xf32> -> vector<8x64xf32>
    %c0_10 = arith.constant 0 : index
    %c0_11 = arith.constant 0 : index
    %11 = vector.load %arg6[%c0_10, %c0_11] : memref<1x64xf32, #tpu.memory_space<vmem>>, vector<1x64xf32>
    %12 = vector.broadcast %11 : vector<1x64xf32> to vector<8x64xf32>
    %13 = arith.addf %10, %12 : vector<8x64xf32>
    %14 = arith.mulf %8, %13 : vector<8x64xf32>
    %cst_12 = arith.constant 0.000000e+00 : f32
    %15 = vector.broadcast %cst_12 : f32 to vector<8x64xf32>
    %16 = arith.maximumf %14, %15 : vector<8x64xf32>
    %17 = arith.truncf %16 : vector<8x64xf32> to vector<8x64xbf16>
    %c0_13 = arith.constant 0 : index
    %c0_14 = arith.constant 0 : index
    %18 = vector.load %arg7[%c0_13, %c0_14] : memref<64x16xbf16, #tpu.memory_space<vmem>>, vector<64x16xbf16>
    %cst_15 = arith.constant dense<0.000000e+00> : vector<8x16xf32>
    %19 = tpu.matmul %17, %18, %cst_15 {dimension_numbers = #tpu.dot_dimension_numbers<[1], [0], [0], [1], [0, 0, 1, 1], [], []>} : vector<8x64xbf16>, vector<64x16xbf16>, vector<8x16xf32> -> vector<8x16xf32>
    %c0_16 = arith.constant 0 : index
    %c0_17 = arith.constant 0 : index
    %20 = vector.load %arg8[%c0_16, %c0_17] : memref<1x16xf32, #tpu.memory_space<vmem>>, vector<1x16xf32>
    %21 = vector.broadcast %20 : vector<1x16xf32> to vector<8x16xf32>
    %22 = arith.addf %19, %21 : vector<8x16xf32>
    %c0_18 = arith.constant 0 : index
    %c0_19 = arith.constant 0 : index
    %23 = vector.load %arg9[%c0_18, %c0_19] : memref<8x16xf32, #tpu.memory_space<vmem>>, vector<8x16xf32>
    tpu.vector_store %arg9[%c0_18, %c0_19], %22 {strides = array<i32>} : memref<8x16xf32, #tpu.memory_space<vmem>>, vector<8x16xf32>,
    return
  }
  func.func @transform_0(%arg0: i32) -> (i32, i32) {
    %c0_i32 = arith.constant 0 : i32
    %c0_i32_0 = arith.constant 0 : i32
    return %arg0, %c0_i32 : i32, i32
  }
  func.func @transform_1(%arg0: i32) -> (i32, i32) {
    %c0_i32 = arith.constant 0 : i32
    %c0_i32_0 = arith.constant 0 : i32
    return %arg0, %c0_i32 : i32, i32
  }
  func.func @transform_2(%arg0: i32) -> (i32, i32) {
    %c0_i32 = arith.constant 0 : i32
    %c0_i32_0 = arith.constant 0 : i32
    %c0_i32_1 = arith.constant 0 : i32
    return %c0_i32, %c0_i32_0 : i32, i32
  }
  func.func @transform_3(%arg0: i32) -> (i32, i32) {
    %c0_i32 = arith.constant 0 : i32
    %c0_i32_0 = arith.constant 0 : i32
    %c0_i32_1 = arith.constant 0 : i32
    return %c0_i32, %c0_i32_0 : i32, i32
  }
  func.func @transform_4(%arg0: i32) -> (i32, i32) {
    %c0_i32 = arith.constant 0 : i32
    %c0_i32_0 = arith.constant 0 : i32
    %c0_i32_1 = arith.constant 0 : i32
    return %c0_i32, %c0_i32_0 : i32, i32
  }
  func.func @transform_5(%arg0: i32) -> (i32, i32) {
    %c0_i32 = arith.constant 0 : i32
    %c0_i32_0 = arith.constant 0 : i32
    %c0_i32_1 = arith.constant 0 : i32
    return %c0_i32, %c0_i32_0 : i32, i32
  }
  func.func @transform_6(%arg0: i32) -> (i32, i32) {
    %c0_i32 = arith.constant 0 : i32
    %c0_i32_0 = arith.constant 0 : i32
    %c0_i32_1 = arith.constant 0 : i32
    return %c0_i32, %c0_i32_0 : i32, i32
  }
  func.func @transform_7(%arg0: i32) -> (i32, i32) {
    %c0_i32 = arith.constant 0 : i32
    %c0_i32_0 = arith.constant 0 : i32
    %c0_i32_1 = arith.constant 0 : i32
    return %c0_i32, %c0_i32_0 : i32, i32
  }
  func.func @transform_8(%arg0: i32) -> (i32, i32) {
    %c0_i32 = arith.constant 0 : i32
    %c0_i32_0 = arith.constant 0 : i32
    return %arg0, %c0_i32 : i32, i32
  }
}

</mosaic_0001>

<llo_original>
// kernel: tpu_custom_call.1
$region0: #{tpu_custom_call.1}
  #allocation0 [shape = 'u32[]', space=smem, size = 0x4, offset = 0x4, fixed_abs, tag = 'smem constant byte address 0x4 - core index']
  #allocation1 [shape = 'u32[144,128]{1,0:T(1,128)}', space=vmem, size = 0x12000, scoped, tag = 'internal scratch']
  %s0 = inlined_call_operand.hbm [shape: f32[8,32], index: 0, kind: input, shape index: {}]
  %s1 = inlined_call_operand.hbm [shape: f32[8,48], index: 1, kind: input, shape index: {}]
  %s2 = inlined_call_operand.vmem [shape: bf16[32,64], index: 2, kind: input, shape index: {}]
  %s3 = inlined_call_operand.vmem [shape: f32[1,64], index: 3, kind: input, shape index: {}]
  %s4 = inlined_call_operand.vmem [shape: bf16[48,64], index: 4, kind: input, shape index: {}]
  %s5 = inlined_call_operand.vmem [shape: f32[1,64], index: 5, kind: input, shape index: {}]
  %s6 = inlined_call_operand.vmem [shape: bf16[64,16], index: 6, kind: input, shape index: {}]
  %s7 = inlined_call_operand.vmem [shape: f32[1,16], index: 7, kind: input, shape index: {}]
  %s8 = inlined_call_operand.hbm [shape: f32[8,16], index: 8, kind: output, shape index: {}]
  %s9 = sld [smem:[#allocation0]]
  $region50: #{tpu_custom_call.1} parent=0
    _
  %s11 = ssub.s32 1, %s9
  %s12 = scalar_select 0, %s11, %s9
  $region1: #{tpu_custom_call.1} parent=0
    #allocation2 [shape = 'u8[4096]{0}', space=vmem, size = 0x1000, scoped, tag = 'input window, operand 0, single buffered']
    #allocation3 [shape = 's32[1]{0}', space=sflag, size = 0x4, scoped, tag = 'scoped memory for tpu_custom_call.1']
    #allocation4 [shape = 's32[1]{0}', space=sflag, size = 0x4, scoped, tag = 'scoped memory for tpu_custom_call.1']
    #allocation5 [shape = 'u8[4096]{0}', space=vmem, size = 0x1000, scoped, tag = 'input window, operand 1, single buffered']
    #allocation6 [shape = 's32[1]{0}', space=sflag, size = 0x4, scoped, tag = 'scoped memory for tpu_custom_call.1']
    #allocation7 [shape = 'u8[4096]{0}', space=vmem, size = 0x1000, scoped, tag = 'output window, operand 0, single buffered']
    %13 = vsyncpa [#allocation3], 0
    %14 = vsyncpa [#allocation6], 0
    %15 = vsyncpa [#allocation4], 0
    // Predicated region
    $region2: #{tpu_custom_call.1} parent=1 // pred_check
      _
    $region3: #{tpu_custom_call.1} parent=1 // pred_check_branch
      %17 = sbr.rel (0) target = $region5
    $region4: #{tpu_custom_call.1} parent=1 // pred_region
      %s19 = ssub.s32 128, 128
      %20 = vsyncadd [#allocation3], %s19
      %s22 = sshll.u32 [#allocation2], 4
      %s23 = int_to_ptr.vmem [resolvable:$true] %s22
      %25 = dma.hbm_to_vmem [thread:$0]  %s0, 128, %s23, [#allocation3]
    $region5: #{tpu_custom_call.1} parent=1 // pred_fallthru
      _
    // Predicated region
    $region6: #{tpu_custom_call.1} parent=1 // pred_check
      _
    $region7: #{tpu_custom_call.1} parent=1 // pred_check_branch
      %27 = sbr.rel (0) target = $region9
    $region8: #{tpu_custom_call.1} parent=1 // pred_region
      %s29 = ssub.s32 128, 128
      %30 = vsyncadd [#allocation6], %s29
      %s32 = sshll.u32 [#allocation5], 4
      %s33 = int_to_ptr.vmem [resolvable:$true] %s32
      %35 = dma.hbm_to_vmem [thread:$0]  %s1, 128, %s33, [#allocation6]
    $region9: #{tpu_custom_call.1} parent=1 // pred_fallthru
      _
    // Predicated region
    $region10: #{tpu_custom_call.1} parent=1 // pred_check
      _
    $region11: #{tpu_custom_call.1} parent=1 // pred_check_branch
      %37 = sbr.rel (0) target = $region13
    $region12: #{tpu_custom_call.1} parent=1 // pred_region
      _
    $region13: #{tpu_custom_call.1} parent=1 // pred_fallthru
      _
    // Predicated region
    $region14: #{tpu_custom_call.1} parent=1 // pred_check
      _
    $region15: #{tpu_custom_call.1} parent=1 // pred_check_branch
      %39 = sbr.rel (0) target = $region17
    $region16: #{tpu_custom_call.1} parent=1 // pred_region
      _
    $region17: #{tpu_custom_call.1} parent=1 // pred_fallthru
      _
    // Predicated region
    $region18: #{tpu_custom_call.1} parent=1 // pred_check
      _
    $region19: #{tpu_custom_call.1} parent=1 // pred_check_branch
      %41 = sbr.rel (0) target = $region21
    $region20: #{tpu_custom_call.1} parent=1 // pred_region
      _
    $region21: #{tpu_custom_call.1} parent=1 // pred_fallthru
      _
    // Predicated region
    $region22: #{tpu_custom_call.1} parent=1 // pred_check
      _
    $region23: #{tpu_custom_call.1} parent=1 // pred_check_branch
      %43 = sbr.rel (0) target = $region25
    $region24: #{tpu_custom_call.1} parent=1 // pred_region
      _
    $region25: #{tpu_custom_call.1} parent=1 // pred_fallthru
      _
    // Predicated region
    $region26: #{tpu_custom_call.1} parent=1 // pred_check
      _
    $region27: #{tpu_custom_call.1} parent=1 // pred_check_branch
      %45 = sbr.rel (0) target = $region29
    $region28: #{tpu_custom_call.1} parent=1 // pred_region
      _
    $region29: #{tpu_custom_call.1} parent=1 // pred_fallthru
      _
    // Predicated region
    $region30: #{tpu_custom_call.1} parent=1 // pred_check
      _
    $region31: #{tpu_custom_call.1} parent=1 // pred_check_branch
      %47 = sbr.rel (0) target = $region33
    $region32: #{tpu_custom_call.1} parent=1 // pred_region
      _
    $region33: #{tpu_custom_call.1} parent=1 // pred_fallthru
      _
    // Predicated region
    $region34: #{tpu_custom_call.1} parent=1 // pred_check
      _
    $region35: #{tpu_custom_call.1} parent=1 // pred_check_branch
      %49 = sbr.rel (0) target = $region37
    $region36: #{tpu_custom_call.1} parent=1 // pred_region
      %50 = dma.done [#allocation3], 128
    $region37: #{tpu_custom_call.1} parent=1 // pred_fallthru
      _
    // Predicated region
    $region38: #{tpu_custom_call.1} parent=1 // pred_check
      _
    $region39: #{tpu_custom_call.1} parent=1 // pred_check_branch
      %52 = sbr.rel (0) target = $region41
    $region40: #{tpu_custom_call.1} parent=1 // pred_region
      %53 = dma.done [#allocation6], 128
    $region41: #{tpu_custom_call.1} parent=1 // pred_fallthru
      _
    %v55 = vld [vmem:[#allocation2] sm:$0xff]
    %v56 = vpack.c.bf16 %v55, %v55
    %v57 = vld [vmem:[#allocation5] sm:$0xff]
    %v58 = vpack.c.bf16 %v57, %v57
    %v59 = vld [vmem:[%s2] sm:$0xf]
    %v60 = vld [vmem:[%s2 + $0x4] sm:$0xf]
    %v61 = vld [vmem:[%s2 + $0x8] sm:$0xf]
    %v62 = vld [vmem:[%s2 + $0xc] sm:$0xf]
    %v63 = vld [vmem:[%s3] sm:$0x1]
    %v65 = vlaneseq
    %v66 = vshrl.u32 %v65, 7
    %v67 = vsub.s32 0, %v66
    %v68 = vrot.slane %v63, %v67
    %v74 = vunpack.c.l.b16 %v59
    %v75 = vunpack.c.l.b16 %v60
    %v76 = vunpack.c.l.b16 %v61
    %v77 = vunpack.c.l.b16 %v62
    %v78 = vpack.c.b16 %v75, %v74
    %v79 = vpack.c.b16 %v77, %v76
    %vm82 = vcmask 261120
    %v84 = vsel %vm82, %v56, 0
    %86 = vmatprep.subr.bf16.mxu0 0
    %87 = vmatpush1.bf16.msra.mxu0 %v78
    %88 = vmatprep.subr.bf16.mxu0 0
    %89 = vmatpush1.bf16.msra.mxu0 %v79
    %90 = vmatprep.subr.bf16.mxu0 0
    %91 = vmatpush1.bf16.msra.mxu0 0
    %92 = vmatprep.subr.bf16.mxu0 0
    %93 = vmatpush1.bf16.msra.mxu0 0
    %94 = vmatprep.subr.bf16.mxu0 0
    %95 = vmatpush1.bf16.msra.mxu0 0
    %96 = vmatprep.subr.bf16.mxu0 0
    %97 = vmatpush1.bf16.msra.mxu0 0
    %98 = vmatprep.subr.bf16.mxu0 0
    %99 = vmatpush1.bf16.msra.mxu0 0
    %100 = vmatprep.subr.bf16.mxu0 0
    %101 = vmatpush1.bf16.msra.mxu0 0
    %102 = vmatprep.subr.bf16.mxu0 0
    %103 = vmatpush1.bf16.msra.mxu0 0
    %104 = vmatprep.subr.bf16.mxu0 0
    %105 = vmatpush1.bf16.msra.mxu0 0
    %106 = vmatprep.subr.bf16.mxu0 0
    %107 = vmatpush1.bf16.msra.mxu0 0
    %108 = vmatprep.subr.bf16.mxu0 0
    %109 = vmatpush1.bf16.msra.mxu0 0
    %110 = vmatprep.subr.bf16.mxu0 0
    %111 = vmatpush1.bf16.msra.mxu0 0
    %112 = vmatprep.subr.bf16.mxu0 0
    %113 = vmatpush1.bf16.msra.mxu0 0
    %114 = vmatprep.subr.bf16.mxu0 0
    %115 = vmatpush1.bf16.msra.mxu0 0
    %116 = vmatprep.subr.bf16.mxu0 0
    %117 = vmatpush1.bf16.msra.mxu0 0
    %118 = vmatprep.mubr.bf16.mxu0 0
    %119 = vmatmul.mubr.bf16.gmra.mrb[0].mxu0 %v84
    %v120 = vpop.f32.mrb[0].mxu0
    %v121 = vadd.f32 %v68, %v120
    %v122 = vpop.f32.mrb[0].mxu0
    %v123 = vpop.f32.mrb[0].mxu0
    %v124 = vpop.f32.mrb[0].mxu0
    %125 = vdwg.mxu0
    %v126 = vld [vmem:[%s4] sm:$0xf]
    %v127 = vld [vmem:[%s4 + $0x4] sm:$0xf]
    %v128 = vld [vmem:[%s4 + $0x8] sm:$0xf]
    %v129 = vld [vmem:[%s4 + $0xc] sm:$0xf]
    %v130 = vld [vmem:[%s4 + $0x10] sm:$0xf]
    %v131 = vld [vmem:[%s4 + $0x14] sm:$0xf]
    %v132 = vld [vmem:[%s5] sm:$0x1]
    %v134 = vlaneseq
    %v135 = vshrl.u32 %v134, 7
    %v136 = vsub.s32 0, %v135
    %v137 = vrot.slane %v132, %v136
    %v145 = vunpack.c.l.b16 %v126
    %v146 = vunpack.c.l.b16 %v127
    %v147 = vunpack.c.l.b16 %v128
    %v148 = vunpack.c.l.b16 %v129
    %v149 = vunpack.c.l.b16 %v130
    %v150 = vunpack.c.l.b16 %v131
    %v151 = vpack.c.b16 %v146, %v145
    %v152 = vpack.c.b16 %v148, %v147
    %v153 = vpack.c.b16 %v150, %v149
    %vm157 = vcmask 392192
    %v159 = vsel %vm157, %v58, 0
    %161 = vmatprep.subr.bf16.mxu0 0
    %162 = vmatpush1.bf16.msra.mxu0 %v151
    %163 = vmatprep.subr.bf16.mxu0 0
    %164 = vmatpush1.bf16.msra.mxu0 %v152
    %165 = vmatprep.subr.bf16.mxu0 0
    %166 = vmatpush1.bf16.msra.mxu0 %v153
    %167 = vmatprep.subr.bf16.mxu0 0
    %168 = vmatpush1.bf16.msra.mxu0 0
    %169 = vmatprep.subr.bf16.mxu0 0
    %170 = vmatpush1.bf16.msra.mxu0 0
    %171 = vmatprep.subr.bf16.mxu0 0
    %172 = vmatpush1.bf16.msra.mxu0 0
    %173 = vmatprep.subr.bf16.mxu0 0
    %174 = vmatpush1.bf16.msra.mxu0 0
    %175 = vmatprep.subr.bf16.mxu0 0
    %176 = vmatpush1.bf16.msra.mxu0 0
    %177 = vmatprep.subr.bf16.mxu0 0
    %178 = vmatpush1.bf16.msra.mxu0 0
    %179 = vmatprep.subr.bf16.mxu0 0
    %180 = vmatpush1.bf16.msra.mxu0 0
    %181 = vmatprep.subr.bf16.mxu0 0
    %182 = vmatpush1.bf16.msra.mxu0 0
    %183 = vmatprep.subr.bf16.mxu0 0
    %184 = vmatpush1.bf16.msra.mxu0 0
    %185 = vmatprep.subr.bf16.mxu0 0
    %186 = vmatpush1.bf16.msra.mxu0 0
    %187 = vmatprep.subr.bf16.mxu0 0
    %188 = vmatpush1.bf16.msra.mxu0 0
    %189 = vmatprep.subr.bf16.mxu0 0
    %190 = vmatpush1.bf16.msra.mxu0 0
    %191 = vmatprep.subr.bf16.mxu0 0
    %192 = vmatpush1.bf16.msra.mxu0 0
    %193 = vmatprep.mubr.bf16.mxu0 0
    %194 = vmatmul.mubr.bf16.gmra.mrb[0].mxu0 %v159
    %v195 = vpop.f32.mrb[0].mxu0
    %v196 = vadd.f32 %v137, %v195
    %v197 = vpop.f32.mrb[0].mxu0
    %v198 = vpop.f32.mrb[0].mxu0
    %v199 = vpop.f32.mrb[0].mxu0
    %200 = vdwg.mxu0
    %v201 = vmul.f32 %v121, %v196
    %v202 = vmax.f32 %v201, 0.0
    %v203 = vpack.c.bf16 %v202, %v202
    %v204 = vld [vmem:[%s6] sm:$0xf]
    %v205 = vld [vmem:[%s6 + $0x4] sm:$0xf]
    %v206 = vld [vmem:[%s6 + $0x8] sm:$0xf]
    %v207 = vld [vmem:[%s6 + $0xc] sm:$0xf]
    %v208 = vld [vmem:[%s6 + $0x10] sm:$0xf]
    %v209 = vld [vmem:[%s6 + $0x14] sm:$0xf]
    %v210 = vld [vmem:[%s6 + $0x18] sm:$0xf]
    %v211 = vld [vmem:[%s6 + $0x1c] sm:$0xf]
    %v212 = vld [vmem:[%s7] sm:$0x1]
    %v214 = vlaneseq
    %v215 = vshrl.u32 %v214, 7
    %v216 = vsub.s32 0, %v215
    %v217 = vrot.slane %v212, %v216
    %v227 = vunpack.c.l.b16 %v204
    %v228 = vunpack.c.l.b16 %v205
    %v229 = vunpack.c.l.b16 %v206
    %v230 = vunpack.c.l.b16 %v207
    %v231 = vunpack.c.l.b16 %v208
    %v232 = vunpack.c.l.b16 %v209
    %v233 = vunpack.c.l.b16 %v210
    %v234 = vunpack.c.l.b16 %v211
    %v235 = vpack.c.b16 %v228, %v227
    %v236 = vpack.c.b16 %v230, %v229
    %v237 = vpack.c.b16 %v232, %v231
    %v238 = vpack.c.b16 %v234, %v233
    %vm243 = vcmask 523264
    %v245 = vsel %vm243, %v203, 0
    %247 = vmatprep.subr.bf16.mxu0 0
    %248 = vmatpush1.bf16.msra.mxu0 %v235
    %249 = vmatprep.subr.bf16.mxu0 0
    %250 = vmatpush1.bf16.msra.mxu0 %v236
    %251 = vmatprep.subr.bf16.mxu0 0
    %252 = vmatpush1.bf16.msra.mxu0 %v237
    %253 = vmatprep.subr.bf16.mxu0 0
    %254 = vmatpush1.bf16.msra.mxu0 %v238
    %255 = vmatprep.subr.bf16.mxu0 0
    %256 = vmatpush1.bf16.msra.mxu0 0
    %257 = vmatprep.subr.bf16.mxu0 0
    %258 = vmatpush1.bf16.msra.mxu0 0
    %259 = vmatprep.subr.bf16.mxu0 0
    %260 = vmatpush1.bf16.msra.mxu0 0
    %261 = vmatprep.subr.bf16.mxu0 0
    %262 = vmatpush1.bf16.msra.mxu0 0
    %263 = vmatprep.subr.bf16.mxu0 0
    %264 = vmatpush1.bf16.msra.mxu0 0
    %265 = vmatprep.subr.bf16.mxu0 0
    %266 = vmatpush1.bf16.msra.mxu0 0
    %267 = vmatprep.subr.bf16.mxu0 0
    %268 = vmatpush1.bf16.msra.mxu0 0
    %269 = vmatprep.subr.bf16.mxu0 0
    %270 = vmatpush1.bf16.msra.mxu0 0
    %271 = vmatprep.subr.bf16.mxu0 0
    %272 = vmatpush1.bf16.msra.mxu0 0
    %273 = vmatprep.subr.bf16.mxu0 0
    %274 = vmatpush1.bf16.msra.mxu0 0
    %275 = vmatprep.subr.bf16.mxu0 0
    %276 = vmatpush1.bf16.msra.mxu0 0
    %277 = vmatprep.subr.bf16.mxu0 0
    %278 = vmatpush1.bf16.msra.mxu0 0
    %279 = vmatprep.mubr.bf16.mxu0 0
    %280 = vmatmul.mubr.bf16.gmra.mrb[0].mxu0 %v245
    %v281 = vpop.f32.mrb[0].mxu0
    %v282 = vadd.f32 %v217, %v281
    %v283 = vpop.f32.mrb[0].mxu0
    %v284 = vpop.f32.mrb[0].mxu0
    %v285 = vpop.f32.mrb[0].mxu0
    %286 = vdwg.mxu0
    %vm287 = vcmask 130048
    %288 = vst.msk [vmem:[#allocation7] sm:$0xff] %vm287, %v282
    // Predicated region
    $region42: #{tpu_custom_call.1} parent=1 // pred_check
      _
    $region43: #{tpu_custom_call.1} parent=1 // pred_check_branch
      %290 = sbr.rel (0) target = $region45
    $region44: #{tpu_custom_call.1} parent=1 // pred_region
      %s292 = ssub.s32 128, 128
      %293 = vsyncadd [#allocation4], %s292
      %s295 = sshll.u32 [#allocation7], 4
      %s296 = int_to_ptr.vmem [resolvable:$true] %s295
      %298 = dma.vmem_to_hbm [thread:$0]  %s296, 128, %s8, [#allocation4]
    $region45: #{tpu_custom_call.1} parent=1 // pred_fallthru
      _
    // Predicated region
    $region46: #{tpu_custom_call.1} parent=1 // pred_check
      _
    $region47: #{tpu_custom_call.1} parent=1 // pred_check_branch
      %300 = sbr.rel (0) target = $region49
    $region48: #{tpu_custom_call.1} parent=1 // pred_region
      %301 = dma.done [#allocation4], 128
    $region49: #{tpu_custom_call.1} parent=1 // pred_fallthru
      _
    %302 = vsyncpa [#allocation3], 1
    %303 = vsyncpa [#allocation6], 1
    %304 = vsyncpa [#allocation4], 1

</llo_original>
